<compile_context>
chip_gen: v7x
topology: tpu7x:2x2x1
jax: 0.10.0
libtpu: 0.0.40
codegen_flags: <defaults>
</compile_context>

<pallas_src>
import functools
import math

import jax
import jax.numpy as jnp
from jax.experimental import pallas as pl
from jax.experimental.pallas import tpu as pltpu

EPS = 1e-08
_LANE = 128
_SUBLANE = 8


def _cdiv(a, b):
    return (a + b - 1) // b


def _logl1_partial_kernel(p_ref, t_ref, out_ref, *,
                          block_rows, rows, tiles_per_split, needs_mask):
    """Accumulate per-lane |p - t| sums into the resident (1, Bblk, 8, 128) block."""
    j = pl.program_id(2)

    @pl.when(j == 0)
    def _init():
        out_ref[...] = jnp.zeros_like(out_ref)

    p = p_ref[...].astype(jnp.float32)            # (Bblk, block_rows, 128)
    t = t_ref[...].astype(jnp.float32)
    d = jnp.abs(p - t)
    b_blk = d.shape[0]

    def _accumulate(vals):
        # Combine sublane groups with plain VPU vreg adds (no per-step XLU).
        partial = vals.reshape(b_blk, block_rows // _SUBLANE, _SUBLANE, _LANE).sum(axis=1)
        out_ref[...] += partial[None]

    if not needs_mask:
        _accumulate(d)
    else:
        # Global (unclamped) row-tile index for this step.
        g = pl.program_id(0) * tiles_per_split + j
        is_edge = (g + 1) * block_rows > rows

        @pl.when((g + 1) * block_rows <= rows)
        def _full():                               # interior tiles: no mask cost
            _accumulate(d)

        @pl.when(is_edge)
        def _masked():                             # partial / overrun tiles only
            row_ids = jax.lax.broadcasted_iota(jnp.int32, d.shape, 1)
            valid = rows - g * block_rows          # <= 0 for fully-overrun tiles
            _accumulate(jnp.where(row_ids < valid, d, 0.0))


def log_l1_loss(predictions, target, *, vmem_block_bytes=4 << 20):
    """Pallas implementation of LogL1.forward. Returns a scalar float32."""
    assert predictions.shape == target.shape
    assert predictions.dtype == target.dtype
    assert predictions.ndim in (3, 4)

    B = predictions.shape[0] if predictions.ndim == 4 else 1
    N = math.prod(predictions.shape) // B
    itemsize = jnp.dtype(predictions.dtype).itemsize

    p = predictions.reshape(B, N)
    t = target.reshape(B, N)

    # Kernel runs over the 128-aligned prefix; any <128-element per-sample tail
    # (only when C*H*W % 128 != 0) is summed in plain JAX instead of materializing
    # padded copies of both inputs (which would double HBM traffic).
    aligned = (N // _LANE) * _LANE
    rows = aligned // _LANE

    if rows < _SUBLANE:
        # Fewer than 1024 elements per sample: not worth a kernel launch.
        diff_sum = jnp.sum(jnp.abs(p.astype(jnp.float32) - t.astype(jnp.float32)), axis=1)
        return 10.0 * jnp.mean(jnp.log10(diff_sum + EPS))

    tail_sum = 0.0
    if aligned != N:
        tail_sum = jnp.sum(
            jnp.abs(p[:, aligned:].astype(jnp.float32) - t[:, aligned:].astype(jnp.float32)),
            axis=1)
        # Rare fallback; the prefix slice may materialize a copy for odd widths.
        p = p[:, :aligned]
        t = t[:, :aligned]

    p = p.reshape(B, rows, _LANE)      # free reshape when no slice happened
    t = t.reshape(B, rows, _LANE)

    # Row tiling: ~vmem_block_bytes per input per step (8192 rows f32 / 16384 bf16).
    # Keep row tiles aligned to full packed vregs for sub-32-bit dtypes.
    row_mult = _SUBLANE * max(1, 4 // itemsize)            # 8 f32, 16 bf16, 32 int8
    target_rows = max(row_mult,
                      (vmem_block_bytes // (_LANE * itemsize)) // row_mult * row_mult)
    block_rows = min(target_rows, (rows // row_mult) * row_mult)
    if block_rows == 0:                                    # rows in [8, row_mult)
        block_rows = (rows // _SUBLANE) * _SUBLANE
    num_tiles = _cdiv(rows, block_rows)

    # Small per-sample data: pack several batch samples per step so each DMA stays
    # MiB-sized instead of dominated by the ~0.35 us fixed per-step overhead.
    b_blk = max(1, min(B, target_rows // block_rows, 512))
    num_b_blocks = _cdiv(B, b_blk)

    # Split the row-tile range across both v7x TensorCores; harmless elsewhere.
    split = 2 if num_tiles >= 2 else 1
    tiles_per_split = _cdiv(num_tiles, split)
    clamp_overrun = split * tiles_per_split != num_tiles
    needs_mask = (rows % block_rows != 0) or clamp_overrun

    def in_index_map(s, b, j):
        g = s * tiles_per_split + j
        if clamp_overrun:
            # Overrun tile re-reads the last real tile; it is fully masked in-kernel.
            g = jnp.minimum(g, num_tiles - 1)
        return (b, g, 0)

    kernel = functools.partial(_logl1_partial_kernel, block_rows=block_rows,
                               rows=rows, tiles_per_split=tiles_per_split,
                               needs_mask=needs_mask)

    # 2 inputs x 2 buffers x block + 2 output buffers + headroom; set explicitly so
    # the shared 4 MiB-per-input config also fits v5e's 16 MiB scoped-VMEM default
    # while staying within v7x's 64 MiB physical VMEM.
    in_block_bytes = b_blk * block_rows * _LANE * itemsize
    out_block_bytes = b_blk * _SUBLANE * _LANE * 4
    vmem_limit = int(min(64 << 20,
                         max(32 << 20,
                             4 * in_block_bytes + 4 * out_block_bytes + (2 << 20))))

    partials = pl.pallas_call(
        kernel,
        out_shape=jax.ShapeDtypeStruct((split, B, _SUBLANE, _LANE), jnp.float32),
        grid_spec=pltpu.PrefetchScalarGridSpec(
            num_scalar_prefetch=0,
            grid=(split, num_b_blocks, tiles_per_split),
            in_specs=[
                pl.BlockSpec((b_blk, block_rows, _LANE), in_index_map),
                pl.BlockSpec((b_blk, block_rows, _LANE), in_index_map),
            ],
            out_specs=pl.BlockSpec((1, b_blk, _SUBLANE, _LANE),
                                   lambda s, b, j: (s, b, 0, 0)),
        ),
        compiler_params=pltpu.CompilerParams(
            dimension_semantics=("parallel", "parallel", "arbitrary"),
            vmem_limit_bytes=vmem_limit),
        cost_estimate=pl.CostEstimate(
            flops=3 * B * rows * _LANE,
            transcendentals=0,
            bytes_accessed=2 * B * rows * _LANE * itemsize
            + split * B * _SUBLANE * _LANE * 4),
    )(p, t)

    # Tiny finalization in plain JAX: cross-lane reduce of (split, B, 8, 128),
    # tail add, log10, mean, *10.
    diff_sum = jnp.sum(partials, axis=(0, 2, 3)) + tail_sum        # (B,)
    return 10.0 * jnp.mean(jnp.log10(diff_sum + EPS))


def _reference(predictions, target):
    dims = (1, 2, 3) if predictions.ndim == 4 else (0, 1, 2)
    diff_sum = jnp.sum(
        jnp.abs(predictions.astype(jnp.float32) - target.astype(jnp.float32)),
        axis=dims)
    return 10.0 * jnp.mean(jnp.log10(diff_sum + EPS))


if __name__ == "__main__":
    key = jax.random.PRNGKey(0)

    def check(pred, targ, rtol=1e-5, atol=1e-5, **kw):
        loss = jax.block_until_ready(log_l1_loss(pred, targ, **kw))
        ref = _reference(pred, targ)
        assert jnp.allclose(loss, ref, rtol=rtol, atol=atol), (loss, ref)

    # 1) 4D (B, C, H, W) f32 — per-sample reduction, batch-packed single step.
    key, k1, k2 = jax.random.split(key, 3)
    pred = jax.random.normal(k1, (2, 4, 16, 16), dtype=jnp.float32)
    targ = jax.random.normal(k2, (2, 4, 16, 16), dtype=jnp.float32)
    check(pred, targ)

    # 2) 3D (C, H, W) — reduction over all dims (B = 1).
    check(pred[0], targ[0])

    # 3) bf16 inputs — native-dtype HBM reads, in-kernel f32 accumulation.
    check(pred.astype(jnp.bfloat16), targ.astype(jnp.bfloat16), rtol=1e-4, atol=1e-4)

    # 4) rows not a multiple of 8: dual-core split + masked partial last row tile.
    key, k1, k2 = jax.random.split(key, 3)
    p4 = jax.random.normal(k1, (1, 2, 5, 128), dtype=jnp.float32)
    t4 = jax.random.normal(k2, (1, 2, 5, 128), dtype=jnp.float32)
    check(p4, t4)

    # 5) 3 row tiles at a small block size: dual-core split with a clamped
    #    overrun tile + a masked partial tile + multiple batch blocks.
    key, k1, k2 = jax.random.split(key, 3)
    p5 = jax.random.normal(k1, (2, 1, 328, 128), dtype=jnp.float32)
    t5 = jax.random.normal(k2, (2, 1, 328, 128), dtype=jnp.float32)
    check(p5, t5, vmem_block_bytes=64 << 10)

    # 6) C*H*W not a multiple of 128: kernel on the aligned prefix + JAX tail sum.
    key, k1, k2 = jax.random.split(key, 3)
    p6 = jax.random.normal(k1, (2, 2, 10, 70), dtype=jnp.float32)
    t6 = jax.random.normal(k2, (2, 2, 10, 70), dtype=jnp.float32)
    check(p6, t6)

    print("KERNEL_OK")
</pallas_src>

<mosaic_0001>
module attributes {stable_mosaic.version = 11 : i64} {
  func.func @_logl1_partial_kernel(%arg0: i32, %arg1: i32, %arg2: i32, %arg3: memref<2x8x128xf32, #tpu.memory_space<vmem>>, %arg4: memref<2x8x128xf32, #tpu.memory_space<vmem>>, %arg5: memref<1x2x8x128xf32, #tpu.memory_space<vmem>>) attributes {dimension_semantics = [#tpu.dimension_semantics<parallel>, #tpu.dimension_semantics<parallel>, #tpu.dimension_semantics<arbitrary>], iteration_bounds = array<i64: 1, 1, 1>, scalar_prefetch = 0 : i64, scratch_operands = 0 : i64, tpu.core_type = #tpu.core_type<tc>, window_params = [{transform_indices = @transform_0, window_bounds = array<i64: 2, 8, 128>}, {transform_indices = @transform_1, window_bounds = array<i64: 2, 8, 128>}, {transform_indices = @transform_2, window_bounds = array<i64: 1, 2, 8, 128>}]} {
    %c0_i32 = arith.constant 0 : i32
    %0 = arith.cmpi eq, %arg2, %c0_i32 : i32
    %1 = arith.extui %0 : i1 to i32
    %c0_i32_0 = arith.constant 0 : i32
    %2 = arith.cmpi ne, %1, %c0_i32_0 : i32
    scf.if %2 {
      %cst_14 = arith.constant 0.000000e+00 : f32
      %13 = vector.broadcast %cst_14 : f32 to vector<1x2x8x128xf32>
      %c0_15 = arith.constant 0 : index
      %c0_16 = arith.constant 0 : index
      %c0_17 = arith.constant 0 : index
      %c0_18 = arith.constant 0 : index
      %14 = vector.load %arg5[%c0_15, %c0_16, %c0_17, %c0_18] : memref<1x2x8x128xf32, #tpu.memory_space<vmem>>, vector<1x2x8x128xf32>
      tpu.vector_store %arg5[%c0_15, %c0_16, %c0_17, %c0_18], %13 {strides = array<i32>} : memref<1x2x8x128xf32, #tpu.memory_space<vmem>>, vector<1x2x8x128xf32>,
    } else {
    }
    %c0 = arith.constant 0 : index
    %c0_1 = arith.constant 0 : index
    %c0_2 = arith.constant 0 : index
    %3 = vector.load %arg3[%c0, %c0_1, %c0_2] : memref<2x8x128xf32, #tpu.memory_space<vmem>>, vector<2x8x128xf32>
    %c0_3 = arith.constant 0 : index
    %c0_4 = arith.constant 0 : index
    %c0_5 = arith.constant 0 : index
    %4 = vector.load %arg4[%c0_3, %c0_4, %c0_5] : memref<2x8x128xf32, #tpu.memory_space<vmem>>, vector<2x8x128xf32>
    %5 = arith.subf %3, %4 : vector<2x8x128xf32>
    %6 = math.absf %5 : vector<2x8x128xf32>
    %7 = vector.shape_cast %6 : vector<2x8x128xf32> to vector<2x1x8x128xf32>
    %cst = arith.constant dense<0.000000e+00> : vector<2x8x128xf32>
    %8 = vector.multi_reduction <add>, %7, %cst [1] : vector<2x1x8x128xf32> to vector<2x8x128xf32>
    %c0_6 = arith.constant 0 : index
    %c0_7 = arith.constant 0 : index
    %c0_8 = arith.constant 0 : index
    %c0_9 = arith.constant 0 : index
    %9 = vector.load %arg5[%c0_6, %c0_7, %c0_8, %c0_9] : memref<1x2x8x128xf32, #tpu.memory_space<vmem>>, vector<1x2x8x128xf32>
    %10 = vector.shape_cast %8 : vector<2x8x128xf32> to vector<1x2x8x128xf32>
    %11 = arith.addf %9, %10 : vector<1x2x8x128xf32>
    %c0_10 = arith.constant 0 : index
    %c0_11 = arith.constant 0 : index
    %c0_12 = arith.constant 0 : index
    %c0_13 = arith.constant 0 : index
    %12 = vector.load %arg5[%c0_10, %c0_11, %c0_12, %c0_13] : memref<1x2x8x128xf32, #tpu.memory_space<vmem>>, vector<1x2x8x128xf32>
    tpu.vector_store %arg5[%c0_10, %c0_11, %c0_12, %c0_13], %11 {strides = array<i32>} : memref<1x2x8x128xf32, #tpu.memory_space<vmem>>, vector<1x2x8x128xf32>,
    return
  }
  func.func @transform_0(%arg0: i32, %arg1: i32, %arg2: i32) -> (i32, i32, i32) {
    %c1_i32 = arith.constant 1 : i32
    %0 = arith.muli %arg0, %c1_i32 : i32
    %1 = arith.addi %0, %arg2 : i32
    %c0_i32 = arith.constant 0 : i32
    %c0_i32_0 = arith.constant 0 : i32
    return %arg1, %1, %c0_i32 : i32, i32, i32
  }
  func.func @transform_1(%arg0: i32, %arg1: i32, %arg2: i32) -> (i32, i32, i32) {
    %c1_i32 = arith.constant 1 : i32
    %0 = arith.muli %arg0, %c1_i32 : i32
    %1 = arith.addi %0, %arg2 : i32
    %c0_i32 = arith.constant 0 : i32
    %c0_i32_0 = arith.constant 0 : i32
    return %arg1, %1, %c0_i32 : i32, i32, i32
  }
  func.func @transform_2(%arg0: i32, %arg1: i32, %arg2: i32) -> (i32, i32, i32, i32) {
    %c0_i32 = arith.constant 0 : i32
    %c0_i32_0 = arith.constant 0 : i32
    %c0_i32_1 = arith.constant 0 : i32
    return %arg0, %arg1, %c0_i32, %c0_i32_0 : i32, i32, i32, i32
  }
}

</mosaic_0001>

<llo_original>
// kernel: tpu_custom_call.1
$region0: #{tpu_custom_call.1}
  #allocation0 [shape = 'u32[]', space=smem, size = 0x4, offset = 0x4, fixed_abs, tag = 'smem constant byte address 0x4 - core index']
  #allocation1 [shape = 'u32[144,128]{1,0:T(1,128)}', space=vmem, size = 0x12000, scoped, tag = 'internal scratch']
  %s0 = inlined_call_operand.hbm [shape: f32[2,8,128], index: 0, kind: input, shape index: {}]
  %s1 = inlined_call_operand.hbm [shape: f32[2,8,128], index: 1, kind: input, shape index: {}]
  %s2 = inlined_call_operand.hbm [shape: f32[1,2,8,128], index: 2, kind: output, shape index: {}]
  %s3 = sld [smem:[#allocation0]]
  $region30: #{tpu_custom_call.1} parent=0
    _
  %s5 = ssub.s32 1, %s3
  %s6 = scalar_select 0, %s5, %s3
  $region1: #{tpu_custom_call.1} parent=0
    #allocation2 [shape = 'u8[8192]{0}', space=vmem, size = 0x2000, scoped, tag = 'input window, operand 0, single buffered']
    #allocation3 [shape = 's32[1]{0}', space=sflag, size = 0x4, scoped, tag = 'scoped memory for tpu_custom_call.1']
    #allocation4 [shape = 's32[1]{0}', space=sflag, size = 0x4, scoped, tag = 'scoped memory for tpu_custom_call.1']
    #allocation5 [shape = 'u8[8192]{0}', space=vmem, size = 0x2000, scoped, tag = 'input window, operand 1, single buffered']
    #allocation6 [shape = 's32[1]{0}', space=sflag, size = 0x4, scoped, tag = 'scoped memory for tpu_custom_call.1']
    #allocation7 [shape = 'u8[8192]{0}', space=vmem, size = 0x2000, scoped, tag = 'output window, operand 0, single buffered']
    %7 = vsyncpa [#allocation3], 0
    %8 = vsyncpa [#allocation6], 0
    %9 = vsyncpa [#allocation4], 0
    // Predicated region
    $region2: #{tpu_custom_call.1} parent=1 // pred_check
      _
    $region3: #{tpu_custom_call.1} parent=1 // pred_check_branch
      %11 = sbr.rel (0) target = $region5
    $region4: #{tpu_custom_call.1} parent=1 // pred_region
      %s12 = sadd.s32 0, 0
      %s14 = ssub.s32 256, 256
      %15 = vsyncadd [#allocation3], %s14
      %s16 = smul.addr %s12, 128
      %s17 = scalar_lea.hbm %s0, %s16
      %s18 = sshll.u32 [#allocation2], 4
      %s19 = int_to_ptr.vmem [resolvable:$true] %s18
      %24 = dma.hbm_to_vmem [thread:$0]  %s17, 256, %s19, [#allocation3], 128, 128, 8
    $region5: #{tpu_custom_call.1} parent=1 // pred_fallthru
      _
    // Predicated region
    $region6: #{tpu_custom_call.1} parent=1 // pred_check
      _
    $region7: #{tpu_custom_call.1} parent=1 // pred_check_branch
      %26 = sbr.rel (0) target = $region9
    $region8: #{tpu_custom_call.1} parent=1 // pred_region
      %s27 = sadd.s32 0, 0
      %s29 = ssub.s32 256, 256
      %30 = vsyncadd [#allocation6], %s29
      %s31 = smul.addr %s27, 128
      %s32 = scalar_lea.hbm %s1, %s31
      %s33 = sshll.u32 [#allocation5], 4
      %s34 = int_to_ptr.vmem [resolvable:$true] %s33
      %39 = dma.hbm_to_vmem [thread:$0]  %s32, 256, %s34, [#allocation6], 128, 128, 8
    $region9: #{tpu_custom_call.1} parent=1 // pred_fallthru
      _
    // Predicated region
    $region10: #{tpu_custom_call.1} parent=1 // pred_check
      _
    $region11: #{tpu_custom_call.1} parent=1 // pred_check_branch
      %41 = sbr.rel (0) target = $region13
    $region12: #{tpu_custom_call.1} parent=1 // pred_region
      %42 = dma.done [#allocation3], 256
    $region13: #{tpu_custom_call.1} parent=1 // pred_fallthru
      _
    // Predicated region
    $region14: #{tpu_custom_call.1} parent=1 // pred_check
      _
    $region15: #{tpu_custom_call.1} parent=1 // pred_check_branch
      %44 = sbr.rel (0) target = $region17
    $region16: #{tpu_custom_call.1} parent=1 // pred_region
      %45 = dma.done [#allocation6], 256
    $region17: #{tpu_custom_call.1} parent=1 // pred_fallthru
      _
    %s46 = sadd.s32 0, 0
    %s47 = sadd.s32 0, 0
    %p48 = scmp.eq.s32.totalorder 0, 0
    // Predicated region
    $region18: #{tpu_custom_call.1} parent=1 // pred_check
      %p49 = pneg %p48
    $region19: #{tpu_custom_call.1} parent=1 // pred_check_branch
      %51 = sbr.rel (%p49) target = $region21
    $region20: #{tpu_custom_call.1} parent=1 // pred_region
      %52 = vst [vmem:[#allocation7] sm:$0xff] 0.0
      %53 = vst [vmem:[#allocation7 + $0x8] sm:$0xff] 0.0
    $region21: #{tpu_custom_call.1} parent=1 // pred_fallthru
      _
    %v54 = vld [vmem:[#allocation2] sm:$0xff]
    %v55 = vld [vmem:[#allocation2 + $0x8] sm:$0xff]
    %v56 = vld [vmem:[#allocation5] sm:$0xff]
    %v57 = vld [vmem:[#allocation5 + $0x8] sm:$0xff]
    %v58 = vsub.f32 %v54, %v56
    %v59 = vsub.f32 %v55, %v57
    %v60 = vand.u32 2147483647, %v58
    %v61 = vand.u32 2147483647, %v59
    %v62 = vadd.f32 %v60, 0.0
    %v63 = vadd.f32 %v61, 0.0
    %v64 = vld [vmem:[#allocation7] sm:$0xff]
    %v65 = vld [vmem:[#allocation7 + $0x8] sm:$0xff]
    %v66 = vadd.f32 %v64, %v62
    %v67 = vadd.f32 %v65, %v63
    %68 = vst [vmem:[#allocation7] sm:$0xff] %v66
    %69 = vst [vmem:[#allocation7 + $0x8] sm:$0xff] %v67
    // Predicated region
    $region22: #{tpu_custom_call.1} parent=1 // pred_check
      _
    $region23: #{tpu_custom_call.1} parent=1 // pred_check_branch
      %71 = sbr.rel (0) target = $region25
    $region24: #{tpu_custom_call.1} parent=1 // pred_region
      %s73 = ssub.s32 256, 256
      %74 = vsyncadd [#allocation4], %s73
      %s75 = sshll.u32 [#allocation7], 4
      %s76 = int_to_ptr.vmem [resolvable:$true] %s75
      %81 = dma.vmem_to_hbm [thread:$0]  %s76, 256, %s2, [#allocation4], 128, 128, 8
    $region25: #{tpu_custom_call.1} parent=1 // pred_fallthru
      _
    // Predicated region
    $region26: #{tpu_custom_call.1} parent=1 // pred_check
      _
    $region27: #{tpu_custom_call.1} parent=1 // pred_check_branch
      %83 = sbr.rel (0) target = $region29
    $region28: #{tpu_custom_call.1} parent=1 // pred_region
      %84 = dma.done [#allocation4], 256
    $region29: #{tpu_custom_call.1} parent=1 // pred_fallthru
      _
    %85 = vsyncpa [#allocation3], 1
    %86 = vsyncpa [#allocation6], 1
    %87 = vsyncpa [#allocation4], 1

</llo_original>
